<compile_context>
chip_gen: v5e
topology: v5e:2x2
jax: 0.10.0
libtpu: 0.0.40
codegen_flags: <defaults>
</compile_context>

<pallas_src>
import functools
import math

import jax
import jax.numpy as jnp
from jax.experimental import pallas as pl
from jax.experimental.pallas import tpu as pltpu


def _ipe_kernel(means_ref, vars_ref, out_ref, *, min_deg, max_deg,
                use_recurrence):
    # means_ref / vars_ref : (3, TN) channel-major VMEM tiles.
    # out_ref              : (6*L, TN) channel-major VMEM tile.
    m = means_ref[...].astype(jnp.float32)
    v = vars_ref[...].astype(jnp.float32)
    num_levels = max_deg - min_deg

    if not use_recurrence:
        # Exact path: exp/sin/cos per level (EUP), lane-dense stores.
        for lvl in range(num_levels):
            scale = float(2.0 ** (min_deg + lvl))
            sm = m * scale
            damp = jnp.exp((-0.5 * scale * scale) * v)
            out_ref[6 * lvl:6 * lvl + 3, :] = (
                damp * jnp.sin(sm)).astype(out_ref.dtype)
            out_ref[6 * lvl + 3:6 * lvl + 6, :] = (
                damp * jnp.cos(sm)).astype(out_ref.dtype)
    else:
        # EUP-light path: transcendentals only at level 0, then VPU recurrences
        #   damp_{l+1} = (damp_l^2)^2        (scale doubles => var quadruples)
        #   sin(2x)    = 2 sin(x) cos(x)
        #   cos(2x)    = 1 - 2 sin(x)^2
        scale0 = float(2.0 ** min_deg)
        damp = jnp.exp((-0.5 * scale0 * scale0) * v)
        s = jnp.sin(m * scale0)
        c = jnp.cos(m * scale0)
        for lvl in range(num_levels):
            out_ref[6 * lvl:6 * lvl + 3, :] = (damp * s).astype(out_ref.dtype)
            out_ref[6 * lvl + 3:6 * lvl + 6, :] = (damp * c).astype(out_ref.dtype)
            if lvl + 1 < num_levels:
                d2 = damp * damp
                damp = d2 * d2
                s_new = 2.0 * s * c
                c = 1.0 - 2.0 * (s * s)
                s = s_new


def integrated_pos_enc(means, variances, min_deg, max_deg, *,
                       tile_cols=2048, out_dtype=jnp.float32,
                       use_angle_recurrence=False):
    """means, variances: [..., 3] -> [..., 2*3*(max_deg-min_deg)]."""
    assert means.shape == variances.shape
    assert means.shape[-1] == 3
    assert max_deg > min_deg
    num_levels = max_deg - min_deg
    out_cols = 6 * num_levels

    lead_shape = means.shape[:-1]
    n = math.prod(lead_shape) if lead_shape else 1

    # Channel-major presentation: rows on the lane axis.  (Input is tiny vs.
    # the output, so this transpose is cheap; the output transpose back is the
    # price for keeping the module's [..., 6L] contract.)
    means_cm = means.reshape(n, 3).astype(jnp.float32).T      # (3, n)
    vars_cm = variances.reshape(n, 3).astype(jnp.float32).T   # (3, n)

    def _round_up(x, m):
        return ((x + m - 1) // m) * m

    # Big lane-dense tiles; cap so we never exceed the (128-rounded) extent.
    tn = min(int(tile_cols), _round_up(n, 128))
    grid = (pl.cdiv(n, tn),)

    kernel = functools.partial(
        _ipe_kernel, min_deg=min_deg, max_deg=max_deg,
        use_recurrence=use_angle_recurrence)

    out_cm = pl.pallas_call(
        kernel,
        out_shape=jax.ShapeDtypeStruct((out_cols, n), out_dtype),
        grid_spec=pltpu.PrefetchScalarGridSpec(
            num_scalar_prefetch=0,
            grid=grid,
            in_specs=[
                pl.BlockSpec((3, tn), lambda i: (0, i)),
                pl.BlockSpec((3, tn), lambda i: (0, i)),
            ],
            out_specs=pl.BlockSpec((out_cols, tn), lambda i: (0, i)),
        ),
        compiler_params=pltpu.CompilerParams(
            dimension_semantics=("parallel",)),
    )(means_cm, vars_cm)

    # Back to row-major [..., 6L] to match the module's output contract.
    return out_cm.T.reshape(*lead_shape, out_cols)


def _ipe_reference(means, variances, min_deg, max_deg):
    scales = 2.0 ** jnp.arange(min_deg, max_deg, dtype=jnp.float32)       # [L]
    sm = means[..., None, :] * scales[:, None]                            # [..., L, 3]
    sv = variances[..., None, :] * (scales[:, None] ** 2)                 # [..., L, 3]
    enc = jnp.concatenate(
        [jnp.exp(-0.5 * sv) * jnp.sin(sm), jnp.exp(-0.5 * sv) * jnp.cos(sm)],
        axis=-1)                                                          # [..., L, 6]
    return enc.reshape(*means.shape[:-1], -1)


if __name__ == "__main__":
    min_deg, max_deg = 0, 4  # num_levels = 4 -> output feature dim 24

    key = jax.random.PRNGKey(0)
    k_m, k_v = jax.random.split(key)
    # Small ray batch: [num_rays=2, samples_per_ray=128, 3]
    means = jax.random.normal(k_m, (2, 128, 3), dtype=jnp.float32)
    variances = jax.nn.softplus(jax.random.normal(k_v, (2, 128, 3),
                                                  dtype=jnp.float32)) * 0.1

    ref = _ipe_reference(means, variances, min_deg, max_deg)

    # Exact path.
    out = integrated_pos_enc(means, variances, min_deg, max_deg)
    out = jax.block_until_ready(out)
    assert out.shape == (2, 128, 2 * 3 * (max_deg - min_deg)), out.shape
    assert jnp.allclose(out, ref, atol=1e-5, rtol=1e-5)

    # EUP-light (double-angle recurrence) path — mathematically identical,
    # slightly different rounding, so a marginally looser tolerance.
    out2 = integrated_pos_enc(means, variances, min_deg, max_deg,
                              use_angle_recurrence=True)
    out2 = jax.block_until_ready(out2)
    assert out2.shape == out.shape
    assert jnp.allclose(out2, ref, atol=1e-4, rtol=1e-4)

    print("KERNEL_OK")
</pallas_src>

<mosaic_0001>
module attributes {stable_mosaic.version = 11 : i64} {
  func.func @_ipe_kernel(%arg0: i32, %arg1: memref<3x256xf32, #tpu.memory_space<vmem>>, %arg2: memref<3x256xf32, #tpu.memory_space<vmem>>, %arg3: memref<24x256xf32, #tpu.memory_space<vmem>>) attributes {dimension_semantics = [#tpu.dimension_semantics<parallel>], iteration_bounds = array<i64: 1>, scalar_prefetch = 0 : i64, scratch_operands = 0 : i64, tpu.core_type = #tpu.core_type<tc>, window_params = [{transform_indices = @transform_0, window_bounds = array<i64: 3, 256>}, {transform_indices = @transform_1, window_bounds = array<i64: 3, 256>}, {transform_indices = @transform_2, window_bounds = array<i64: 24, 256>}]} {
    %c0 = arith.constant 0 : index
    %c0_0 = arith.constant 0 : index
    %0 = vector.load %arg1[%c0, %c0_0] : memref<3x256xf32, #tpu.memory_space<vmem>>, vector<3x256xf32>
    %c0_1 = arith.constant 0 : index
    %c0_2 = arith.constant 0 : index
    %1 = vector.load %arg2[%c0_1, %c0_2] : memref<3x256xf32, #tpu.memory_space<vmem>>, vector<3x256xf32>
    %cst = arith.constant 1.000000e+00 : f32
    %2 = vector.broadcast %cst : f32 to vector<3x256xf32>
    %3 = arith.mulf %0, %2 : vector<3x256xf32>
    %cst_3 = arith.constant -5.000000e-01 : f32
    %4 = vector.broadcast %cst_3 : f32 to vector<3x256xf32>
    %5 = arith.mulf %4, %1 : vector<3x256xf32>
    %6 = math.exp %5 : vector<3x256xf32>
    %7 = math.sin %3 : vector<3x256xf32>
    %8 = arith.mulf %6, %7 : vector<3x256xf32>
    %c0_4 = arith.constant 0 : index
    %c0_5 = arith.constant 0 : index
    %9 = vector.load %arg3[%c0_4, %c0_5] : memref<24x256xf32, #tpu.memory_space<vmem>>, vector<3x256xf32>
    tpu.vector_store %arg3[%c0_4, %c0_5], %8 {strides = array<i32>} : memref<24x256xf32, #tpu.memory_space<vmem>>, vector<3x256xf32>,
    %10 = math.cos %3 : vector<3x256xf32>
    %11 = arith.mulf %6, %10 : vector<3x256xf32>
    %c3 = arith.constant 3 : index
    %c0_6 = arith.constant 0 : index
    %12 = vector.load %arg3[%c3, %c0_6] : memref<24x256xf32, #tpu.memory_space<vmem>>, vector<3x256xf32>
    tpu.vector_store %arg3[%c3, %c0_6], %11 {strides = array<i32>} : memref<24x256xf32, #tpu.memory_space<vmem>>, vector<3x256xf32>,
    %cst_7 = arith.constant 2.000000e+00 : f32
    %13 = vector.broadcast %cst_7 : f32 to vector<3x256xf32>
    %14 = arith.mulf %0, %13 : vector<3x256xf32>
    %cst_8 = arith.constant -2.000000e+00 : f32
    %15 = vector.broadcast %cst_8 : f32 to vector<3x256xf32>
    %16 = arith.mulf %15, %1 : vector<3x256xf32>
    %17 = math.exp %16 : vector<3x256xf32>
    %18 = math.sin %14 : vector<3x256xf32>
    %19 = arith.mulf %17, %18 : vector<3x256xf32>
    %c6 = arith.constant 6 : index
    %c0_9 = arith.constant 0 : index
    %20 = vector.load %arg3[%c6, %c0_9] : memref<24x256xf32, #tpu.memory_space<vmem>>, vector<3x256xf32>
    tpu.vector_store %arg3[%c6, %c0_9], %19 {strides = array<i32>} : memref<24x256xf32, #tpu.memory_space<vmem>>, vector<3x256xf32>,
    %21 = math.cos %14 : vector<3x256xf32>
    %22 = arith.mulf %17, %21 : vector<3x256xf32>
    %c9 = arith.constant 9 : index
    %c0_10 = arith.constant 0 : index
    %23 = vector.load %arg3[%c9, %c0_10] : memref<24x256xf32, #tpu.memory_space<vmem>>, vector<3x256xf32>
    tpu.vector_store %arg3[%c9, %c0_10], %22 {strides = array<i32>} : memref<24x256xf32, #tpu.memory_space<vmem>>, vector<3x256xf32>,
    %cst_11 = arith.constant 4.000000e+00 : f32
    %24 = vector.broadcast %cst_11 : f32 to vector<3x256xf32>
    %25 = arith.mulf %0, %24 : vector<3x256xf32>
    %cst_12 = arith.constant -8.000000e+00 : f32
    %26 = vector.broadcast %cst_12 : f32 to vector<3x256xf32>
    %27 = arith.mulf %26, %1 : vector<3x256xf32>
    %28 = math.exp %27 : vector<3x256xf32>
    %29 = math.sin %25 : vector<3x256xf32>
    %30 = arith.mulf %28, %29 : vector<3x256xf32>
    %c12 = arith.constant 12 : index
    %c0_13 = arith.constant 0 : index
    %31 = vector.load %arg3[%c12, %c0_13] : memref<24x256xf32, #tpu.memory_space<vmem>>, vector<3x256xf32>
    tpu.vector_store %arg3[%c12, %c0_13], %30 {strides = array<i32>} : memref<24x256xf32, #tpu.memory_space<vmem>>, vector<3x256xf32>,
    %32 = math.cos %25 : vector<3x256xf32>
    %33 = arith.mulf %28, %32 : vector<3x256xf32>
    %c15 = arith.constant 15 : index
    %c0_14 = arith.constant 0 : index
    %34 = vector.load %arg3[%c15, %c0_14] : memref<24x256xf32, #tpu.memory_space<vmem>>, vector<3x256xf32>
    tpu.vector_store %arg3[%c15, %c0_14], %33 {strides = array<i32>} : memref<24x256xf32, #tpu.memory_space<vmem>>, vector<3x256xf32>,
    %cst_15 = arith.constant 8.000000e+00 : f32
    %35 = vector.broadcast %cst_15 : f32 to vector<3x256xf32>
    %36 = arith.mulf %0, %35 : vector<3x256xf32>
    %cst_16 = arith.constant -3.200000e+01 : f32
    %37 = vector.broadcast %cst_16 : f32 to vector<3x256xf32>
    %38 = arith.mulf %37, %1 : vector<3x256xf32>
    %39 = math.exp %38 : vector<3x256xf32>
    %40 = math.sin %36 : vector<3x256xf32>
    %41 = arith.mulf %39, %40 : vector<3x256xf32>
    %c18 = arith.constant 18 : index
    %c0_17 = arith.constant 0 : index
    %42 = vector.load %arg3[%c18, %c0_17] : memref<24x256xf32, #tpu.memory_space<vmem>>, vector<3x256xf32>
    tpu.vector_store %arg3[%c18, %c0_17], %41 {strides = array<i32>} : memref<24x256xf32, #tpu.memory_space<vmem>>, vector<3x256xf32>,
    %43 = math.cos %36 : vector<3x256xf32>
    %44 = arith.mulf %39, %43 : vector<3x256xf32>
    %c21 = arith.constant 21 : index
    %c0_18 = arith.constant 0 : index
    %45 = vector.load %arg3[%c21, %c0_18] : memref<24x256xf32, #tpu.memory_space<vmem>>, vector<3x256xf32>
    tpu.vector_store %arg3[%c21, %c0_18], %44 {strides = array<i32>} : memref<24x256xf32, #tpu.memory_space<vmem>>, vector<3x256xf32>,
    return
  }
  func.func @transform_0(%arg0: i32) -> (i32, i32) {
    %c0_i32 = arith.constant 0 : i32
    %c0_i32_0 = arith.constant 0 : i32
    return %c0_i32, %arg0 : i32, i32
  }
  func.func @transform_1(%arg0: i32) -> (i32, i32) {
    %c0_i32 = arith.constant 0 : i32
    %c0_i32_0 = arith.constant 0 : i32
    return %c0_i32, %arg0 : i32, i32
  }
  func.func @transform_2(%arg0: i32) -> (i32, i32) {
    %c0_i32 = arith.constant 0 : i32
    %c0_i32_0 = arith.constant 0 : i32
    return %c0_i32, %arg0 : i32, i32
  }
}

</mosaic_0001>

<llo_original>
// kernel: tpu_custom_call.1
$region0: #{tpu_custom_call.1}
  #allocation0 [shape = 'u32[]', space=smem, size = 0x4, offset = 0x4, fixed_abs, tag = 'smem constant byte address 0x4 - core index']
  #allocation1 [shape = 'u32[72,128]{1,0:T(1,128)}', space=vmem, size = 0x9000, scoped, tag = 'internal scratch']
  %s0 = inlined_call_operand.hbm [shape: f32[3,256], index: 0, kind: input, shape index: {}]
  %s1 = inlined_call_operand.hbm [shape: f32[3,256], index: 1, kind: input, shape index: {}]
  %s2 = inlined_call_operand.hbm [shape: f32[24,256], index: 2, kind: output, shape index: {}]
  %s3 = sld [smem:[#allocation0]]
  $region26: #{tpu_custom_call.1} parent=0
    _
  %s5 = ssub.s32 1, %s3
  %s6 = scalar_select 0, %s5, %s3
  $region1: #{tpu_custom_call.1} parent=0
    #allocation2 [shape = 'u8[4096]{0}', space=vmem, size = 0x1000, scoped, tag = 'input window, operand 0, single buffered']
    #allocation3 [shape = 's32[1]{0}', space=sflag, size = 0x4, scoped, tag = 'scoped memory for tpu_custom_call.1']
    #allocation4 [shape = 's32[1]{0}', space=sflag, size = 0x4, scoped, tag = 'scoped memory for tpu_custom_call.1']
    #allocation5 [shape = 'u8[4096]{0}', space=vmem, size = 0x1000, scoped, tag = 'input window, operand 1, single buffered']
    #allocation6 [shape = 's32[1]{0}', space=sflag, size = 0x4, scoped, tag = 'scoped memory for tpu_custom_call.1']
    #allocation7 [shape = 'u8[24576]{0}', space=vmem, size = 0x6000, scoped, tag = 'output window, operand 0, single buffered']
    %7 = vsyncpa [#allocation3], 0
    %8 = vsyncpa [#allocation6], 0
    %9 = vsyncpa [#allocation4], 0
    // Predicated region
    $region2: #{tpu_custom_call.1} parent=1 // pred_check
      _
    $region3: #{tpu_custom_call.1} parent=1 // pred_check_branch
      %11 = sbr.rel (0) target = $region5
    $region4: #{tpu_custom_call.1} parent=1 // pred_region
      %13 = vsyncadd [#allocation3], 0
      %s15 = sshll.u32 %s0, 4
      %s16 = int_to_ptr.hbm [resolvable:$true] %s15
      %s17 = sshll.u32 [#allocation2], 4
      %s18 = int_to_ptr.vmem [resolvable:$true] %s17
      %20 = dma.hbm_to_vmem [thread:$0]  %s16, 128, %s18, [#allocation3]
    $region5: #{tpu_custom_call.1} parent=1 // pred_fallthru
      _
    // Predicated region
    $region6: #{tpu_custom_call.1} parent=1 // pred_check
      _
    $region7: #{tpu_custom_call.1} parent=1 // pred_check_branch
      %22 = sbr.rel (0) target = $region9
    $region8: #{tpu_custom_call.1} parent=1 // pred_region
      %24 = vsyncadd [#allocation6], 0
      %s26 = sshll.u32 %s1, 4
      %s27 = int_to_ptr.hbm [resolvable:$true] %s26
      %s28 = sshll.u32 [#allocation5], 4
      %s29 = int_to_ptr.vmem [resolvable:$true] %s28
      %31 = dma.hbm_to_vmem [thread:$0]  %s27, 128, %s29, [#allocation6]
    $region9: #{tpu_custom_call.1} parent=1 // pred_fallthru
      _
    // Predicated region
    $region10: #{tpu_custom_call.1} parent=1 // pred_check
      _
    $region11: #{tpu_custom_call.1} parent=1 // pred_check_branch
      %33 = sbr.rel (0) target = $region13
    $region12: #{tpu_custom_call.1} parent=1 // pred_region
      %35 = dma.done [#allocation3], 128
    $region13: #{tpu_custom_call.1} parent=1 // pred_fallthru
      _
    // Predicated region
    $region14: #{tpu_custom_call.1} parent=1 // pred_check
      _
    $region15: #{tpu_custom_call.1} parent=1 // pred_check_branch
      %37 = sbr.rel (0) target = $region17
    $region16: #{tpu_custom_call.1} parent=1 // pred_region
      %39 = dma.done [#allocation6], 128
    $region17: #{tpu_custom_call.1} parent=1 // pred_fallthru
      _
    %v40 = vld [vmem:[#allocation2] sm:$0x77]
    %v41 = vld [vmem:[#allocation5] sm:$0x77]
    %v42 = vmul.f32 %v41, -0.5
    %v43 = vmul.f32 %v42, 1.442695
    %v44 = vpow.pop %v43
    %v45 = vand.u32 2147483647, %v40
    %vm46 = vcmp.le.f32.partialorder %v45, 0.7853982
    %vm47 = vcmp.lt.s32.totalorder %v40, 0
    %v48 = vand.u32 %v40, 2139095040
    %v49 = vshrl.u32 %v48, 23
    %v50 = vsub.s32 %v49, 127
    %v51 = vand.u32 2147483647, %v40
    %v52 = vand.u32 %v51, 8388607
    %v53 = vor.u32 %v52, 8388608
    %v54 = vsub.s32 0, %v53
    %v55 = vadd.s32 %v50, 1
    %vm56 = vcmp.gt.s32.totalorder %v55, 0
    %v57 = vsel %vm56, %v55, 0
    %v58 = vshrl.u32 %v57, 5
    %v59 = vand.u32 %v57, 31
    %v60 = vsub.s32 32, %v59
    %v61 = vshrl.u32 683565275, %v60
    %v62 = vshll.u32 683565275, %v59
    %v63 = vshrl.u32 2475754826, %v60
    %v64 = vor.u32 %v62, %v63
    %v65 = vshll.u32 2475754826, %v59
    %v66 = vshrl.u32 2131351028, %v60
    %v67 = vor.u32 %v65, %v66
    %v68 = vshll.u32 2131351028, %v59
    %v69 = vshrl.u32 2102212464, %v60
    %v70 = vor.u32 %v68, %v69
    %v71 = vshll.u32 2102212464, %v59
    %v72 = vshrl.u32 920167782, %v60
    %v73 = vor.u32 %v71, %v72
    %v74 = vshll.u32 920167782, %v59
    %v75 = vshrl.u32 1326507024, %v60
    %v76 = vor.u32 %v74, %v75
    %vm77 = vcmp.lt.s32.totalorder %v58, 1
    %vm78 = vcmp.lt.s32.totalorder %v58, 2
    %vm79 = vcmp.lt.s32.totalorder %v58, 3
    %vm80 = vcmp.lt.s32.totalorder %v58, 4
    %v81 = vsel %vm77, %v61, %v64
    %v82 = vsel %vm80, %v70, 2102212464
    %v83 = vsel %vm79, %v67, %v82
    %v84 = vsel %vm78, %v81, %v83
    %v85 = vsel %vm77, %v64, %v67
    %v86 = vsel %vm80, %v73, 920167782
    %v87 = vsel %vm79, %v70, %v86
    %v88 = vsel %vm78, %v85, %v87
    %v89 = vsel %vm77, %v67, %v70
    %v90 = vsel %vm80, %v76, 1326507024
    %v91 = vsel %vm79, %v73, %v90
    %v92 = vsel %vm78, %v89, %v91
    %v93 = vshll.u32 %v53, 8
    %v94 = vand.u32 %v93, 65535
    %v95 = vshrl.u32 %v93, 16
    %v96 = vand.u32 %v92, 65535
    %v97 = vshrl.u32 %v92, 16
    %v98 = vmul.u32 %v94, %v96
    %v99 = vmul.u32 %v94, %v97
    %v100 = vmul.u32 %v95, %v96
    %v101 = vmul.u32 %v95, %v97
    %v102 = vshll.u32 %v99, 16
    %v103 = vshrl.u32 %v99, 16
    %v104 = vshll.u32 %v100, 16
    %v105 = vshrl.u32 %v100, 16
    %vm106 = vc.u32 %v98, %v102
    %v107 = vsel %vm106, 1, 0
    %v108 = vadd.s32 %v98, %v102
    %v109 = vadd.s32 %v101, %v107
    %vm110 = vc.u32 %v108, %v104
    %v111 = vsel %vm110, 1, 0
    %v112 = vadd.s32 %v108, %v104
    %v113 = vadd.s32 %v109, %v111
    %v114 = vadd.s32 %v113, %v103
    %v115 = vadd.s32 %v114, %v105
    %v116 = vand.u32 %v93, 65535
    %v117 = vshrl.u32 %v93, 16
    %v118 = vand.u32 %v88, 65535
    %v119 = vshrl.u32 %v88, 16
    %v120 = vmul.u32 %v116, %v118
    %v121 = vmul.u32 %v116, %v119
    %v122 = vmul.u32 %v117, %v118
    %v123 = vmul.u32 %v117, %v119
    %v124 = vshll.u32 %v121, 16
    %v125 = vshrl.u32 %v121, 16
    %v126 = vshll.u32 %v122, 16
    %v127 = vshrl.u32 %v122, 16
    %vm128 = vc.u32 %v120, %v124
    %v129 = vsel %vm128, 1, 0
    %v130 = vadd.s32 %v120, %v124
    %v131 = vadd.s32 %v123, %v129
    %vm132 = vc.u32 %v130, %v126
    %v133 = vsel %vm132, 1, 0
    %v134 = vadd.s32 %v130, %v126
    %v135 = vadd.s32 %v131, %v133
    %v136 = vadd.s32 %v135, %v125
    %v137 = vadd.s32 %v136, %v127
    %v138 = vmul.u32 %v93, %v84
    %v139 = vadd.s32 %v115, %v134
    %vm140 = vc.u32 %v115, %v134
    %v141 = vadd.s32 %v137, 1
    %v142 = vsel %vm140, %v141, %v137
    %v143 = vadd.s32 %v138, %v142
    %v144 = vadd.s32 %v143, 536870912
    %v145 = vshrl.u32 %v144, 30
    %v146 = vshll.u32 %v145, 30
    %v147 = vsub.s32 %v143, %v146
    %vm148 = vcmp.lt.s32.totalorder %v147, 0
    %v149 = vsub.s32 0, %v147
    %v150 = vsel %vm148, %v149, %v147
    %v151 = vclz %v150
    %v152 = vsub.s32 %v151, 2
    %vm153 = vcmp.gt.s32.totalorder 0, %v152
    %v154 = vsel %vm153, 0, %v152
    %v155 = vsub.s32 32, %v154
    %v156 = vshll.u32 %v147, %v154
    %v157 = vshrl.u32 %v139, %v155
    %v158 = vor.u32 %v156, %v157
    %v159 = vsub.s32 4294967266, %v154
    %v160 = vadd.s32 %v159, 127
    %v161 = vshll.u32 %v160, 23
    %v162 = vor.u32 4788187, %v161
    %v163 = vand.u32 2147483647, %v162
    %v165 = vcvt.s32.f32 %v158
    %v166 = vmul.f32 %v165, %v163
    %v167 = vxor.u32 %v166, 2147483648
    %v168 = vsel %vm47, %v167, %v166
    %v169 = vsub.s32 4, %v145
    %v170 = vsel %vm47, %v169, %v145
    %v171 = vsel %vm46, %v40, %v168
    %v172 = vsel %vm46, 0, %v170
    %v173 = vmul.f32 %v171, %v171
    %v174 = vmul.f32 %v173, -0.001358992
    %v175 = vadd.f32 %v174, 0.041655596
    %v176 = vmul.f32 %v173, %v175
    %v177 = vadd.f32 %v176, -0.4999988
    %v178 = vmul.f32 %v173, %v177
    %v179 = vadd.f32 1.0, %v178
    %v180 = vmul.f32 %v171, %v171
    %v181 = vmul.f32 %v180, -0.00019511016
    %v182 = vadd.f32 %v181, 0.008332121
    %v183 = vmul.f32 %v180, %v182
    %v184 = vadd.f32 %v183, -0.16666654
    %v185 = vmul.f32 %v180, %v184
    %v186 = vadd.f32 %v185, 1.0
    %v187 = vmul.f32 %v186, %v171
    %vm188 = vweird.f32 %v40
    %v189 = vadd.s32 %v172, 3
    %v190 = vand.u32 %v189, 3
    %vm191 = vcmp.lt.s32.totalorder %v190, 2
    %vm192 = vcmp.eq.s32.totalorder %v190, 0
    %v193 = vxor.u32 %v187, 2147483648
    %v194 = vsel %vm192, %v179, %v193
    %vm195 = vcmp.eq.s32.totalorder %v190, 2
    %v196 = vxor.u32 %v179, 2147483648
    %v197 = vsel %vm195, %v196, %v187
    %v198 = vsel %vm191, %v194, %v197
    %v199 = vsel %vm188, nan, %v198
    %v200 = vmul.f32 %v44, %v199
    %202 = vst [vmem:[#allocation1] ss:$2 sm:$0xff] %v200
    %v203 = vld.sshfl [vmem:[#allocation1] sm:$0xff pattern:$0x75316420]
    %v204 = vld.sshfl [vmem:[#allocation1 + $0x8] sm:$0xff pattern:$0x75316420]
    %207 = vst [vmem:[#allocation7] sm:$0x7] %v203
    %208 = vst [vmem:[#allocation7 + $0x8] sm:$0x7] %v204
    %v209 = vand.u32 2147483647, %v40
    %vm210 = vcmp.le.f32.partialorder %v209, 0.7853982
    %vm211 = vcmp.lt.s32.totalorder %v40, 0
    %v212 = vand.u32 %v40, 2139095040
    %v213 = vshrl.u32 %v212, 23
    %v214 = vsub.s32 %v213, 127
    %v215 = vand.u32 2147483647, %v40
    %v216 = vand.u32 %v215, 8388607
    %v217 = vor.u32 %v216, 8388608
    %v218 = vsub.s32 0, %v217
    %v219 = vadd.s32 %v214, 1
    %vm220 = vcmp.gt.s32.totalorder %v219, 0
    %v221 = vsel %vm220, %v219, 0
    %v222 = vshrl.u32 %v221, 5
    %v223 = vand.u32 %v221, 31
    %v224 = vsub.s32 32, %v223
    %v225 = vshrl.u32 683565275, %v224
    %v226 = vshll.u32 683565275, %v223
    %v227 = vshrl.u32 2475754826, %v224
    %v228 = vor.u32 %v226, %v227
    %v229 = vshll.u32 2475754826, %v223
    %v230 = vshrl.u32 2131351028, %v224
    %v231 = vor.u32 %v229, %v230
    %v232 = vshll.u32 2131351028, %v223
    %v233 = vshrl.u32 2102212464, %v224
    %v234 = vor.u32 %v232, %v233
    %v235 = vshll.u32 2102212464, %v223
    %v236 = vshrl.u32 920167782, %v224
    %v237 = vor.u32 %v235, %v236
    %v238 = vshll.u32 920167782, %v223
    %v239 = vshrl.u32 1326507024, %v224
    %v240 = vor.u32 %v238, %v239
    %vm241 = vcmp.lt.s32.totalorder %v222, 1
    %vm242 = vcmp.lt.s32.totalorder %v222, 2
    %vm243 = vcmp.lt.s32.totalorder %v222, 3
    %vm244 = vcmp.lt.s32.totalorder %v222, 4
    %v245 = vsel %vm241, %v225, %v228
    %v246 = vsel %vm244, %v234, 2102212464
    %v247 = vsel %vm243, %v231, %v246
    %v248 = vsel %vm242, %v245, %v247
    %v249 = vsel %vm241, %v228, %v231
    %v250 = vsel %vm244, %v237, 920167782
    %v251 = vsel %vm243, %v234, %v250
    %v252 = vsel %vm242, %v249, %v251
    %v253 = vsel %vm241, %v231, %v234
    %v254 = vsel %vm244, %v240, 1326507024
    %v255 = vsel %vm243, %v237, %v254
    %v256 = vsel %vm242, %v253, %v255
    %v257 = vshll.u32 %v217, 8
    %v258 = vand.u32 %v257, 65535
    %v259 = vshrl.u32 %v257, 16
    %v260 = vand.u32 %v256, 65535
    %v261 = vshrl.u32 %v256, 16
    %v262 = vmul.u32 %v258, %v260
    %v263 = vmul.u32 %v258, %v261
    %v264 = vmul.u32 %v259, %v260
    %v265 = vmul.u32 %v259, %v261
    %v266 = vshll.u32 %v263, 16
    %v267 = vshrl.u32 %v263, 16
    %v268 = vshll.u32 %v264, 16
    %v269 = vshrl.u32 %v264, 16
    %vm270 = vc.u32 %v262, %v266
    %v271 = vsel %vm270, 1, 0
    %v272 = vadd.s32 %v262, %v266
    %v273 = vadd.s32 %v265, %v271
    %vm274 = vc.u32 %v272, %v268
    %v275 = vsel %vm274, 1, 0
    %v276 = vadd.s32 %v272, %v268
    %v277 = vadd.s32 %v273, %v275
    %v278 = vadd.s32 %v277, %v267
    %v279 = vadd.s32 %v278, %v269
    %v280 = vand.u32 %v257, 65535
    %v281 = vshrl.u32 %v257, 16
    %v282 = vand.u32 %v252, 65535
    %v283 = vshrl.u32 %v252, 16
    %v284 = vmul.u32 %v280, %v282
    %v285 = vmul.u32 %v280, %v283
    %v286 = vmul.u32 %v281, %v282
    %v287 = vmul.u32 %v281, %v283
    %v288 = vshll.u32 %v285, 16
    %v289 = vshrl.u32 %v285, 16
    %v290 = vshll.u32 %v286, 16
    %v291 = vshrl.u32 %v286, 16
    %vm292 = vc.u32 %v284, %v288
    %v293 = vsel %vm292, 1, 0
    %v294 = vadd.s32 %v284, %v288
    %v295 = vadd.s32 %v287, %v293
    %vm296 = vc.u32 %v294, %v290
    %v297 = vsel %vm296, 1, 0
    %v298 = vadd.s32 %v294, %v290
    %v299 = vadd.s32 %v295, %v297
    %v300 = vadd.s32 %v299, %v289
    %v301 = vadd.s32 %v300, %v291
    %v302 = vmul.u32 %v257, %v248
    %v303 = vadd.s32 %v279, %v298
    %vm304 = vc.u32 %v279, %v298
    %v305 = vadd.s32 %v301, 1
    %v306 = vsel %vm304, %v305, %v301
    %v307 = vadd.s32 %v302, %v306
    %v308 = vadd.s32 %v307, 536870912
    %v309 = vshrl.u32 %v308, 30
    %v310 = vshll.u32 %v309, 30
    %v311 = vsub.s32 %v307, %v310
    %vm312 = vcmp.lt.s32.totalorder %v311, 0
    %v313 = vsub.s32 0, %v311
    %v314 = vsel %vm312, %v313, %v311
    %v315 = vclz %v314
    %v316 = vsub.s32 %v315, 2
    %vm317 = vcmp.gt.s32.totalorder 0, %v316
    %v318 = vsel %vm317, 0, %v316
    %v319 = vsub.s32 32, %v318
    %v320 = vshll.u32 %v311, %v318
    %v321 = vshrl.u32 %v303, %v319
    %v322 = vor.u32 %v320, %v321
    %v323 = vsub.s32 4294967266, %v318
    %v324 = vadd.s32 %v323, 127
    %v325 = vshll.u32 %v324, 23
    %v326 = vor.u32 4788187, %v325
    %v327 = vand.u32 2147483647, %v326
    %v329 = vcvt.s32.f32 %v322
    %v330 = vmul.f32 %v329, %v327
    %v331 = vxor.u32 %v330, 2147483648
    %v332 = vsel %vm211, %v331, %v330
    %v333 = vsub.s32 4, %v309
    %v334 = vsel %vm211, %v333, %v309
    %v335 = vsel %vm210, %v40, %v332
    %v336 = vsel %vm210, 0, %v334
    %v337 = vmul.f32 %v335, %v335
    %v338 = vmul.f32 %v337, -0.001358992
    %v339 = vadd.f32 %v338, 0.041655596
    %v340 = vmul.f32 %v337, %v339
    %v341 = vadd.f32 %v340, -0.4999988
    %v342 = vmul.f32 %v337, %v341
    %v343 = vadd.f32 1.0, %v342
    %v344 = vmul.f32 %v335, %v335
    %v345 = vmul.f32 %v344, -0.00019511016
    %v346 = vadd.f32 %v345, 0.008332121
    %v347 = vmul.f32 %v344, %v346
    %v348 = vadd.f32 %v347, -0.16666654
    %v349 = vmul.f32 %v344, %v348
    %v350 = vadd.f32 %v349, 1.0
    %v351 = vmul.f32 %v350, %v335
    %vm352 = vweird.f32 %v40
    %v353 = vand.u32 %v336, 3
    %vm354 = vcmp.lt.s32.totalorder %v353, 2
    %vm355 = vcmp.eq.s32.totalorder %v353, 0
    %v356 = vxor.u32 %v351, 2147483648
    %v357 = vsel %vm355, %v343, %v356
    %vm358 = vcmp.eq.s32.totalorder %v353, 2
    %v359 = vxor.u32 %v343, 2147483648
    %v360 = vsel %vm358, %v359, %v351
    %v361 = vsel %vm354, %v357, %v360
    %v362 = vsel %vm352, nan, %v361
    %v363 = vmul.f32 %v44, %v362
    %365 = vst [vmem:[#allocation1] ss:$2 sm:$0xff] %v363
    %v366 = vld.sshfl [vmem:[#allocation1] sm:$0xff pattern:$0x75316420]
    %v367 = vld.sshfl [vmem:[#allocation1 + $0x8] sm:$0xff pattern:$0x75316420]
    %v368 = vrot.slane %v366, 5
    %v369 = vrot.slane %v367, 5
    %372 = vst [vmem:[#allocation7] sm:$0x38] %v368
    %373 = vst [vmem:[#allocation7 + $0x8] sm:$0x38] %v369
    %v374 = vmul.f32 %v40, 2.0
    %v375 = vmul.f32 %v41, -2.0
    %v376 = vmul.f32 %v375, 1.442695
    %v377 = vpow.pop %v376
    %v378 = vand.u32 2147483647, %v374
    %vm379 = vcmp.le.f32.partialorder %v378, 0.7853982
    %vm380 = vcmp.lt.s32.totalorder %v374, 0
    %v381 = vand.u32 %v374, 2139095040
    %v382 = vshrl.u32 %v381, 23
    %v383 = vsub.s32 %v382, 127
    %v384 = vand.u32 2147483647, %v374
    %v385 = vand.u32 %v384, 8388607
    %v386 = vor.u32 %v385, 8388608
    %v387 = vsub.s32 0, %v386
    %v388 = vadd.s32 %v383, 1
    %vm389 = vcmp.gt.s32.totalorder %v388, 0
    %v390 = vsel %vm389, %v388, 0
    %v391 = vshrl.u32 %v390, 5
    %v392 = vand.u32 %v390, 31
    %v393 = vsub.s32 32, %v392
    %v394 = vshrl.u32 683565275, %v393
    %v395 = vshll.u32 683565275, %v392
    %v396 = vshrl.u32 2475754826, %v393
    %v397 = vor.u32 %v395, %v396
    %v398 = vshll.u32 2475754826, %v392
    %v399 = vshrl.u32 2131351028, %v393
    %v400 = vor.u32 %v398, %v399
    %v401 = vshll.u32 2131351028, %v392
    %v402 = vshrl.u32 2102212464, %v393
    %v403 = vor.u32 %v401, %v402
    %v404 = vshll.u32 2102212464, %v392
    %v405 = vshrl.u32 920167782, %v393
    %v406 = vor.u32 %v404, %v405
    %v407 = vshll.u32 920167782, %v392
    %v408 = vshrl.u32 1326507024, %v393
    %v409 = vor.u32 %v407, %v408
    %vm410 = vcmp.lt.s32.totalorder %v391, 1
    %vm411 = vcmp.lt.s32.totalorder %v391, 2
    %vm412 = vcmp.lt.s32.totalorder %v391, 3
    %vm413 = vcmp.lt.s32.totalorder %v391, 4
    %v414 = vsel %vm410, %v394, %v397
    %v415 = vsel %vm413, %v403, 2102212464
    %v416 = vsel %vm412, %v400, %v415
    %v417 = vsel %vm411, %v414, %v416
    %v418 = vsel %vm410, %v397, %v400
    %v419 = vsel %vm413, %v406, 920167782
    %v420 = vsel %vm412, %v403, %v419
    %v421 = vsel %vm411, %v418, %v420
    %v422 = vsel %vm410, %v400, %v403
    %v423 = vsel %vm413, %v409, 1326507024
    %v424 = vsel %vm412, %v406, %v423
    %v425 = vsel %vm411, %v422, %v424
    %v426 = vshll.u32 %v386, 8
    %v427 = vand.u32 %v426, 65535
    %v428 = vshrl.u32 %v426, 16
    %v429 = vand.u32 %v425, 65535
    %v430 = vshrl.u32 %v425, 16
    %v431 = vmul.u32 %v427, %v429
    %v432 = vmul.u32 %v427, %v430
    %v433 = vmul.u32 %v428, %v429
    %v434 = vmul.u32 %v428, %v430
    %v435 = vshll.u32 %v432, 16
    %v436 = vshrl.u32 %v432, 16
    %v437 = vshll.u32 %v433, 16
    %v438 = vshrl.u32 %v433, 16
    %vm439 = vc.u32 %v431, %v435
    %v440 = vsel %vm439, 1, 0
    %v441 = vadd.s32 %v431, %v435
    %v442 = vadd.s32 %v434, %v440
    %vm443 = vc.u32 %v441, %v437
    %v444 = vsel %vm443, 1, 0
    %v445 = vadd.s32 %v441, %v437
    %v446 = vadd.s32 %v442, %v444
    %v447 = vadd.s32 %v446, %v436
    %v448 = vadd.s32 %v447, %v438
    %v449 = vand.u32 %v426, 65535
    %v450 = vshrl.u32 %v426, 16
    %v451 = vand.u32 %v421, 65535
    %v452 = vshrl.u32 %v421, 16
    %v453 = vmul.u32 %v449, %v451
    %v454 = vmul.u32 %v449, %v452
    %v455 = vmul.u32 %v450, %v451
    %v456 = vmul.u32 %v450, %v452
    %v457 = vshll.u32 %v454, 16
    %v458 = vshrl.u32 %v454, 16
    %v459 = vshll.u32 %v455, 16
    %v460 = vshrl.u32 %v455, 16
    %vm461 = vc.u32 %v453, %v457
    %v462 = vsel %vm461, 1, 0
    %v463 = vadd.s32 %v453, %v457
    %v464 = vadd.s32 %v456, %v462
    %vm465 = vc.u32 %v463, %v459
    %v466 = vsel %vm465, 1, 0
    %v467 = vadd.s32 %v463, %v459
    %v468 = vadd.s32 %v464, %v466
    %v469 = vadd.s32 %v468, %v458
    %v470 = vadd.s32 %v469, %v460
    %v471 = vmul.u32 %v426, %v417
    %v472 = vadd.s32 %v448, %v467
    %vm473 = vc.u32 %v448, %v467
    %v474 = vadd.s32 %v470, 1
    %v475 = vsel %vm473, %v474, %v470
    %v476 = vadd.s32 %v471, %v475
    %v477 = vadd.s32 %v476, 536870912
    %v478 = vshrl.u32 %v477, 30
    %v479 = vshll.u32 %v478, 30
    %v480 = vsub.s32 %v476, %v479
    %vm481 = vcmp.lt.s32.totalorder %v480, 0
    %v482 = vsub.s32 0, %v480
    %v483 = vsel %vm481, %v482, %v480
    %v484 = vclz %v483
    %v485 = vsub.s32 %v484, 2
    %vm486 = vcmp.gt.s32.totalorder 0, %v485
    %v487 = vsel %vm486, 0, %v485
    %v488 = vsub.s32 32, %v487
    %v489 = vshll.u32 %v480, %v487
    %v490 = vshrl.u32 %v472, %v488
    %v491 = vor.u32 %v489, %v490
    %v492 = vsub.s32 4294967266, %v487
    %v493 = vadd.s32 %v492, 127
    %v494 = vshll.u32 %v493, 23
    %v495 = vor.u32 4788187, %v494
    %v496 = vand.u32 2147483647, %v495
    %v498 = vcvt.s32.f32 %v491
    %v499 = vmul.f32 %v498, %v496
    %v500 = vxor.u32 %v499, 2147483648
    %v501 = vsel %vm380, %v500, %v499
    %v502 = vsub.s32 4, %v478
    %v503 = vsel %vm380, %v502, %v478
    %v504 = vsel %vm379, %v374, %v501
    %v505 = vsel %vm379, 0, %v503
    %v506 = vmul.f32 %v504, %v504
    %v507 = vmul.f32 %v506, -0.001358992
    %v508 = vadd.f32 %v507, 0.041655596
    %v509 = vmul.f32 %v506, %v508
    %v510 = vadd.f32 %v509, -0.4999988
    %v511 = vmul.f32 %v506, %v510
    %v512 = vadd.f32 1.0, %v511
    %v513 = vmul.f32 %v504, %v504
    %v514 = vmul.f32 %v513, -0.00019511016
    %v515 = vadd.f32 %v514, 0.008332121
    %v516 = vmul.f32 %v513, %v515
    %v517 = vadd.f32 %v516, -0.16666654
    %v518 = vmul.f32 %v513, %v517
    %v519 = vadd.f32 %v518, 1.0
    %v520 = vmul.f32 %v519, %v504
    %vm521 = vweird.f32 %v374
    %v522 = vadd.s32 %v505, 3
    %v523 = vand.u32 %v522, 3
    %vm524 = vcmp.lt.s32.totalorder %v523, 2
    %vm525 = vcmp.eq.s32.totalorder %v523, 0
    %v526 = vxor.u32 %v520, 2147483648
    %v527 = vsel %vm525, %v512, %v526
    %vm528 = vcmp.eq.s32.totalorder %v523, 2
    %v529 = vxor.u32 %v512, 2147483648
    %v530 = vsel %vm528, %v529, %v520
    %v531 = vsel %vm524, %v527, %v530
    %v532 = vsel %vm521, nan, %v531
    %v533 = vmul.f32 %v377, %v532
    %535 = vst [vmem:[#allocation1] ss:$2 sm:$0xff] %v533
    %v536 = vld.sshfl [vmem:[#allocation1] sm:$0xff pattern:$0x75316420]
    %v537 = vld.sshfl [vmem:[#allocation1 + $0x8] sm:$0xff pattern:$0x75316420]
    %v538 = vrot.slane %v536, 2
    %v539 = vrot.slane %v537, 2
    %542 = vst [vmem:[#allocation7] sm:$0xc0] %v538
    %543 = vst [vmem:[#allocation7 + $0x8] sm:$0xc0] %v539
    %544 = vst [vmem:[#allocation7 + $0x10] sm:$0x1] %v538
    %545 = vst [vmem:[#allocation7 + $0x18] sm:$0x1] %v539
    %v546 = vand.u32 2147483647, %v374
    %vm547 = vcmp.le.f32.partialorder %v546, 0.7853982
    %vm548 = vcmp.lt.s32.totalorder %v374, 0
    %v549 = vand.u32 %v374, 2139095040
    %v550 = vshrl.u32 %v549, 23
    %v551 = vsub.s32 %v550, 127
    %v552 = vand.u32 2147483647, %v374
    %v553 = vand.u32 %v552, 8388607
    %v554 = vor.u32 %v553, 8388608
    %v555 = vsub.s32 0, %v554
    %v556 = vadd.s32 %v551, 1
    %vm557 = vcmp.gt.s32.totalorder %v556, 0
    %v558 = vsel %vm557, %v556, 0
    %v559 = vshrl.u32 %v558, 5
    %v560 = vand.u32 %v558, 31
    %v561 = vsub.s32 32, %v560
    %v562 = vshrl.u32 683565275, %v561
    %v563 = vshll.u32 683565275, %v560
    %v564 = vshrl.u32 2475754826, %v561
    %v565 = vor.u32 %v563, %v564
    %v566 = vshll.u32 2475754826, %v560
    %v567 = vshrl.u32 2131351028, %v561
    %v568 = vor.u32 %v566, %v567
    %v569 = vshll.u32 2131351028, %v560
    %v570 = vshrl.u32 2102212464, %v561
    %v571 = vor.u32 %v569, %v570
    %v572 = vshll.u32 2102212464, %v560
    %v573 = vshrl.u32 920167782, %v561
    %v574 = vor.u32 %v572, %v573
    %v575 = vshll.u32 920167782, %v560
    %v576 = vshrl.u32 1326507024, %v561
    %v577 = vor.u32 %v575, %v576
    %vm578 = vcmp.lt.s32.totalorder %v559, 1
    %vm579 = vcmp.lt.s32.totalorder %v559, 2
    %vm580 = vcmp.lt.s32.totalorder %v559, 3
    %vm581 = vcmp.lt.s32.totalorder %v559, 4
    %v582 = vsel %vm578, %v562, %v565
    %v583 = vsel %vm581, %v571, 2102212464
    %v584 = vsel %vm580, %v568, %v583
    %v585 = vsel %vm579, %v582, %v584
    %v586 = vsel %vm578, %v565, %v568
    %v587 = vsel %vm581, %v574, 920167782
    %v588 = vsel %vm580, %v571, %v587
    %v589 = vsel %vm579, %v586, %v588
    %v590 = vsel %vm578, %v568, %v571
    %v591 = vsel %vm581, %v577, 1326507024
    %v592 = vsel %vm580, %v574, %v591
    %v593 = vsel %vm579, %v590, %v592
    %v594 = vshll.u32 %v554, 8
    %v595 = vand.u32 %v594, 65535
    %v596 = vshrl.u32 %v594, 16
    %v597 = vand.u32 %v593, 65535
    %v598 = vshrl.u32 %v593, 16
    %v599 = vmul.u32 %v595, %v597
    %v600 = vmul.u32 %v595, %v598
    %v601 = vmul.u32 %v596, %v597
    %v602 = vmul.u32 %v596, %v598
    %v603 = vshll.u32 %v600, 16
    %v604 = vshrl.u32 %v600, 16
    %v605 = vshll.u32 %v601, 16
    %v606 = vshrl.u32 %v601, 16
    %vm607 = vc.u32 %v599, %v603
    %v608 = vsel %vm607, 1, 0
    %v609 = vadd.s32 %v599, %v603
    %v610 = vadd.s32 %v602, %v608
    %vm611 = vc.u32 %v609, %v605
    %v612 = vsel %vm611, 1, 0
    %v613 = vadd.s32 %v609, %v605
    %v614 = vadd.s32 %v610, %v612
    %v615 = vadd.s32 %v614, %v604
    %v616 = vadd.s32 %v615, %v606
    %v617 = vand.u32 %v594, 65535
    %v618 = vshrl.u32 %v594, 16
    %v619 = vand.u32 %v589, 65535
    %v620 = vshrl.u32 %v589, 16
    %v621 = vmul.u32 %v617, %v619
    %v622 = vmul.u32 %v617, %v620
    %v623 = vmul.u32 %v618, %v619
    %v624 = vmul.u32 %v618, %v620
    %v625 = vshll.u32 %v622, 16
    %v626 = vshrl.u32 %v622, 16
    %v627 = vshll.u32 %v623, 16
    %v628 = vshrl.u32 %v623, 16
    %vm629 = vc.u32 %v621, %v625
    %v630 = vsel %vm629, 1, 0
    %v631 = vadd.s32 %v621, %v625
    %v632 = vadd.s32 %v624, %v630
    %vm633 = vc.u32 %v631, %v627
    %v634 = vsel %vm633, 1, 0
    %v635 = vadd.s32 %v631, %v627
    %v636 = vadd.s32 %v632, %v634
    %v637 = vadd.s32 %v636, %v626
    %v638 = vadd.s32 %v637, %v628
    %v639 = vmul.u32 %v594, %v585
    %v640 = vadd.s32 %v616, %v635
    %vm641 = vc.u32 %v616, %v635
    %v642 = vadd.s32 %v638, 1
    %v643 = vsel %vm641, %v642, %v638
    %v644 = vadd.s32 %v639, %v643
    %v645 = vadd.s32 %v644, 536870912
    %v646 = vshrl.u32 %v645, 30
    %v647 = vshll.u32 %v646, 30
    %v648 = vsub.s32 %v644, %v647
    %vm649 = vcmp.lt.s32.totalorder %v648, 0
    %v650 = vsub.s32 0, %v648
    %v651 = vsel %vm649, %v650, %v648
    %v652 = vclz %v651
    %v653 = vsub.s32 %v652, 2
    %vm654 = vcmp.gt.s32.totalorder 0, %v653
    %v655 = vsel %vm654, 0, %v653
    %v656 = vsub.s32 32, %v655
    %v657 = vshll.u32 %v648, %v655
    %v658 = vshrl.u32 %v640, %v656
    %v659 = vor.u32 %v657, %v658
    %v660 = vsub.s32 4294967266, %v655
    %v661 = vadd.s32 %v660, 127
    %v662 = vshll.u32 %v661, 23
    %v663 = vor.u32 4788187, %v662
    %v664 = vand.u32 2147483647, %v663
    %v666 = vcvt.s32.f32 %v659
    %v667 = vmul.f32 %v666, %v664
    %v668 = vxor.u32 %v667, 2147483648
    %v669 = vsel %vm548, %v668, %v667
    %v670 = vsub.s32 4, %v646
    %v671 = vsel %vm548, %v670, %v646
    %v672 = vsel %vm547, %v374, %v669
    %v673 = vsel %vm547, 0, %v671
    %v674 = vmul.f32 %v672, %v672
    %v675 = vmul.f32 %v674, -0.001358992
    %v676 = vadd.f32 %v675, 0.041655596
    %v677 = vmul.f32 %v674, %v676
    %v678 = vadd.f32 %v677, -0.4999988
    %v679 = vmul.f32 %v674, %v678
    %v680 = vadd.f32 1.0, %v679
    %v681 = vmul.f32 %v672, %v672
    %v682 = vmul.f32 %v681, -0.00019511016
    %v683 = vadd.f32 %v682, 0.008332121
    %v684 = vmul.f32 %v681, %v683
    %v685 = vadd.f32 %v684, -0.16666654
    %v686 = vmul.f32 %v681, %v685
    %v687 = vadd.f32 %v686, 1.0
    %v688 = vmul.f32 %v687, %v672
    %vm689 = vweird.f32 %v374
    %v690 = vand.u32 %v673, 3
    %vm691 = vcmp.lt.s32.totalorder %v690, 2
    %vm692 = vcmp.eq.s32.totalorder %v690, 0
    %v693 = vxor.u32 %v688, 2147483648
    %v694 = vsel %vm692, %v680, %v693
    %vm695 = vcmp.eq.s32.totalorder %v690, 2
    %v696 = vxor.u32 %v680, 2147483648
    %v697 = vsel %vm695, %v696, %v688
    %v698 = vsel %vm691, %v694, %v697
    %v699 = vsel %vm689, nan, %v698
    %v700 = vmul.f32 %v377, %v699
    %702 = vst [vmem:[#allocation1] ss:$2 sm:$0xff] %v700
    %v703 = vld.sshfl [vmem:[#allocation1] sm:$0xff pattern:$0x75316420]
    %v704 = vld.sshfl [vmem:[#allocation1 + $0x8] sm:$0xff pattern:$0x75316420]
    %v705 = vrot.slane %v703, 7
    %v706 = vrot.slane %v704, 7
    %709 = vst [vmem:[#allocation7 + $0x10] sm:$0xe] %v705
    %710 = vst [vmem:[#allocation7 + $0x18] sm:$0xe] %v706
    %v711 = vmul.f32 %v40, 4.0
    %v712 = vmul.f32 %v41, -8.0
    %v713 = vmul.f32 %v712, 1.442695
    %v714 = vpow.pop %v713
    %v715 = vand.u32 2147483647, %v711
    %vm716 = vcmp.le.f32.partialorder %v715, 0.7853982
    %vm717 = vcmp.lt.s32.totalorder %v711, 0
    %v718 = vand.u32 %v711, 2139095040
    %v719 = vshrl.u32 %v718, 23
    %v720 = vsub.s32 %v719, 127
    %v721 = vand.u32 2147483647, %v711
    %v722 = vand.u32 %v721, 8388607
    %v723 = vor.u32 %v722, 8388608
    %v724 = vsub.s32 0, %v723
    %v725 = vadd.s32 %v720, 1
    %vm726 = vcmp.gt.s32.totalorder %v725, 0
    %v727 = vsel %vm726, %v725, 0
    %v728 = vshrl.u32 %v727, 5
    %v729 = vand.u32 %v727, 31
    %v730 = vsub.s32 32, %v729
    %v731 = vshrl.u32 683565275, %v730
    %v732 = vshll.u32 683565275, %v729
    %v733 = vshrl.u32 2475754826, %v730
    %v734 = vor.u32 %v732, %v733
    %v735 = vshll.u32 2475754826, %v729
    %v736 = vshrl.u32 2131351028, %v730
    %v737 = vor.u32 %v735, %v736
    %v738 = vshll.u32 2131351028, %v729
    %v739 = vshrl.u32 2102212464, %v730
    %v740 = vor.u32 %v738, %v739
    %v741 = vshll.u32 2102212464, %v729
    %v742 = vshrl.u32 920167782, %v730
    %v743 = vor.u32 %v741, %v742
    %v744 = vshll.u32 920167782, %v729
    %v745 = vshrl.u32 1326507024, %v730
    %v746 = vor.u32 %v744, %v745
    %vm747 = vcmp.lt.s32.totalorder %v728, 1
    %vm748 = vcmp.lt.s32.totalorder %v728, 2
    %vm749 = vcmp.lt.s32.totalorder %v728, 3
    %vm750 = vcmp.lt.s32.totalorder %v728, 4
    %v751 = vsel %vm747, %v731, %v734
    %v752 = vsel %vm750, %v740, 2102212464
    %v753 = vsel %vm749, %v737, %v752
    %v754 = vsel %vm748, %v751, %v753
    %v755 = vsel %vm747, %v734, %v737
    %v756 = vsel %vm750, %v743, 920167782
    %v757 = vsel %vm749, %v740, %v756
    %v758 = vsel %vm748, %v755, %v757
    %v759 = vsel %vm747, %v737, %v740
    %v760 = vsel %vm750, %v746, 1326507024
    %v761 = vsel %vm749, %v743, %v760
    %v762 = vsel %vm748, %v759, %v761
    %v763 = vshll.u32 %v723, 8
    %v764 = vand.u32 %v763, 65535
    %v765 = vshrl.u32 %v763, 16
    %v766 = vand.u32 %v762, 65535
    %v767 = vshrl.u32 %v762, 16
    %v768 = vmul.u32 %v764, %v766
    %v769 = vmul.u32 %v764, %v767
    %v770 = vmul.u32 %v765, %v766
    %v771 = vmul.u32 %v765, %v767
    %v772 = vshll.u32 %v769, 16
    %v773 = vshrl.u32 %v769, 16
    %v774 = vshll.u32 %v770, 16
    %v775 = vshrl.u32 %v770, 16
    %vm776 = vc.u32 %v768, %v772
    %v777 = vsel %vm776, 1, 0
    %v778 = vadd.s32 %v768, %v772
    %v779 = vadd.s32 %v771, %v777
    %vm780 = vc.u32 %v778, %v774
    %v781 = vsel %vm780, 1, 0
    %v782 = vadd.s32 %v778, %v774
    %v783 = vadd.s32 %v779, %v781
    %v784 = vadd.s32 %v783, %v773
    %v785 = vadd.s32 %v784, %v775
    %v786 = vand.u32 %v763, 65535
    %v787 = vshrl.u32 %v763, 16
    %v788 = vand.u32 %v758, 65535
    %v789 = vshrl.u32 %v758, 16
    %v790 = vmul.u32 %v786, %v788
    %v791 = vmul.u32 %v786, %v789
    %v792 = vmul.u32 %v787, %v788
    %v793 = vmul.u32 %v787, %v789
    %v794 = vshll.u32 %v791, 16
    %v795 = vshrl.u32 %v791, 16
    %v796 = vshll.u32 %v792, 16
    %v797 = vshrl.u32 %v792, 16
    %vm798 = vc.u32 %v790, %v794
    %v799 = vsel %vm798, 1, 0
    %v800 = vadd.s32 %v790, %v794
    %v801 = vadd.s32 %v793, %v799
    %vm802 = vc.u32 %v800, %v796
    %v803 = vsel %vm802, 1, 0
    %v804 = vadd.s32 %v800, %v796
    %v805 = vadd.s32 %v801, %v803
    %v806 = vadd.s32 %v805, %v795
    %v807 = vadd.s32 %v806, %v797
    %v808 = vmul.u32 %v763, %v754
    %v809 = vadd.s32 %v785, %v804
    %vm810 = vc.u32 %v785, %v804
    %v811 = vadd.s32 %v807, 1
    %v812 = vsel %vm810, %v811, %v807
    %v813 = vadd.s32 %v808, %v812
    %v814 = vadd.s32 %v813, 536870912
    %v815 = vshrl.u32 %v814, 30
    %v816 = vshll.u32 %v815, 30
    %v817 = vsub.s32 %v813, %v816
    %vm818 = vcmp.lt.s32.totalorder %v817, 0
    %v819 = vsub.s32 0, %v817
    %v820 = vsel %vm818, %v819, %v817
    %v821 = vclz %v820
    %v822 = vsub.s32 %v821, 2
    %vm823 = vcmp.gt.s32.totalorder 0, %v822
    %v824 = vsel %vm823, 0, %v822
    %v825 = vsub.s32 32, %v824
    %v826 = vshll.u32 %v817, %v824
    %v827 = vshrl.u32 %v809, %v825
    %v828 = vor.u32 %v826, %v827
    %v829 = vsub.s32 4294967266, %v824
    %v830 = vadd.s32 %v829, 127
    %v831 = vshll.u32 %v830, 23
    %v832 = vor.u32 4788187, %v831
    %v833 = vand.u32 2147483647, %v832
    %v835 = vcvt.s32.f32 %v828
    %v836 = vmul.f32 %v835, %v833
    %v837 = vxor.u32 %v836, 2147483648
    %v838 = vsel %vm717, %v837, %v836
    %v839 = vsub.s32 4, %v815
    %v840 = vsel %vm717, %v839, %v815
    %v841 = vsel %vm716, %v711, %v838
    %v842 = vsel %vm716, 0, %v840
    %v843 = vmul.f32 %v841, %v841
    %v844 = vmul.f32 %v843, -0.001358992
    %v845 = vadd.f32 %v844, 0.041655596
    %v846 = vmul.f32 %v843, %v845
    %v847 = vadd.f32 %v846, -0.4999988
    %v848 = vmul.f32 %v843, %v847
    %v849 = vadd.f32 1.0, %v848
    %v850 = vmul.f32 %v841, %v841
    %v851 = vmul.f32 %v850, -0.00019511016
    %v852 = vadd.f32 %v851, 0.008332121
    %v853 = vmul.f32 %v850, %v852
    %v854 = vadd.f32 %v853, -0.16666654
    %v855 = vmul.f32 %v850, %v854
    %v856 = vadd.f32 %v855, 1.0
    %v857 = vmul.f32 %v856, %v841
    %vm858 = vweird.f32 %v711
    %v859 = vadd.s32 %v842, 3
    %v860 = vand.u32 %v859, 3
    %vm861 = vcmp.lt.s32.totalorder %v860, 2
    %vm862 = vcmp.eq.s32.totalorder %v860, 0
    %v863 = vxor.u32 %v857, 2147483648
    %v864 = vsel %vm862, %v849, %v863
    %vm865 = vcmp.eq.s32.totalorder %v860, 2
    %v866 = vxor.u32 %v849, 2147483648
    %v867 = vsel %vm865, %v866, %v857
    %v868 = vsel %vm861, %v864, %v867
    %v869 = vsel %vm858, nan, %v868
    %v870 = vmul.f32 %v714, %v869
    %s872 = scalar_lea.vmem [#allocation1], 1
    %873 = vst [vmem:[%s872] ss:$2 sm:$0xff] %v870
    %v874 = vld.sshfl [vmem:[#allocation1] sm:$0xff pattern:$0x75316420]
    %v875 = vld.sshfl [vmem:[#allocation1 + $0x8] sm:$0xff pattern:$0x75316420]
    %878 = vst [vmem:[#allocation7 + $0x10] sm:$0x70] %v874
    %879 = vst [vmem:[#allocation7 + $0x18] sm:$0x70] %v875
    %v880 = vand.u32 2147483647, %v711
    %vm881 = vcmp.le.f32.partialorder %v880, 0.7853982
    %vm882 = vcmp.lt.s32.totalorder %v711, 0
    %v883 = vand.u32 %v711, 2139095040
    %v884 = vshrl.u32 %v883, 23
    %v885 = vsub.s32 %v884, 127
    %v886 = vand.u32 2147483647, %v711
    %v887 = vand.u32 %v886, 8388607
    %v888 = vor.u32 %v887, 8388608
    %v889 = vsub.s32 0, %v888
    %v890 = vadd.s32 %v885, 1
    %vm891 = vcmp.gt.s32.totalorder %v890, 0
    %v892 = vsel %vm891, %v890, 0
    %v893 = vshrl.u32 %v892, 5
    %v894 = vand.u32 %v892, 31
    %v895 = vsub.s32 32, %v894
    %v896 = vshrl.u32 683565275, %v895
    %v897 = vshll.u32 683565275, %v894
    %v898 = vshrl.u32 2475754826, %v895
    %v899 = vor.u32 %v897, %v898
    %v900 = vshll.u32 2475754826, %v894
    %v901 = vshrl.u32 2131351028, %v895
    %v902 = vor.u32 %v900, %v901
    %v903 = vshll.u32 2131351028, %v894
    %v904 = vshrl.u32 2102212464, %v895
    %v905 = vor.u32 %v903, %v904
    %v906 = vshll.u32 2102212464, %v894
    %v907 = vshrl.u32 920167782, %v895
    %v908 = vor.u32 %v906, %v907
    %v909 = vshll.u32 920167782, %v894
    %v910 = vshrl.u32 1326507024, %v895
    %v911 = vor.u32 %v909, %v910
    %vm912 = vcmp.lt.s32.totalorder %v893, 1
    %vm913 = vcmp.lt.s32.totalorder %v893, 2
    %vm914 = vcmp.lt.s32.totalorder %v893, 3
    %vm915 = vcmp.lt.s32.totalorder %v893, 4
    %v916 = vsel %vm912, %v896, %v899
    %v917 = vsel %vm915, %v905, 2102212464
    %v918 = vsel %vm914, %v902, %v917
    %v919 = vsel %vm913, %v916, %v918
    %v920 = vsel %vm912, %v899, %v902
    %v921 = vsel %vm915, %v908, 920167782
    %v922 = vsel %vm914, %v905, %v921
    %v923 = vsel %vm913, %v920, %v922
    %v924 = vsel %vm912, %v902, %v905
    %v925 = vsel %vm915, %v911, 1326507024
    %v926 = vsel %vm914, %v908, %v925
    %v927 = vsel %vm913, %v924, %v926
    %v928 = vshll.u32 %v888, 8
    %v929 = vand.u32 %v928, 65535
    %v930 = vshrl.u32 %v928, 16
    %v931 = vand.u32 %v927, 65535
    %v932 = vshrl.u32 %v927, 16
    %v933 = vmul.u32 %v929, %v931
    %v934 = vmul.u32 %v929, %v932
    %v935 = vmul.u32 %v930, %v931
    %v936 = vmul.u32 %v930, %v932
    %v937 = vshll.u32 %v934, 16
    %v938 = vshrl.u32 %v934, 16
    %v939 = vshll.u32 %v935, 16
    %v940 = vshrl.u32 %v935, 16
    %vm941 = vc.u32 %v933, %v937
    %v942 = vsel %vm941, 1, 0
    %v943 = vadd.s32 %v933, %v937
    %v944 = vadd.s32 %v936, %v942
    %vm945 = vc.u32 %v943, %v939
    %v946 = vsel %vm945, 1, 0
    %v947 = vadd.s32 %v943, %v939
    %v948 = vadd.s32 %v944, %v946
    %v949 = vadd.s32 %v948, %v938
    %v950 = vadd.s32 %v949, %v940
    %v951 = vand.u32 %v928, 65535
    %v952 = vshrl.u32 %v928, 16
    %v953 = vand.u32 %v923, 65535
    %v954 = vshrl.u32 %v923, 16
    %v955 = vmul.u32 %v951, %v953
    %v956 = vmul.u32 %v951, %v954
    %v957 = vmul.u32 %v952, %v953
    %v958 = vmul.u32 %v952, %v954
    %v959 = vshll.u32 %v956, 16
    %v960 = vshrl.u32 %v956, 16
    %v961 = vshll.u32 %v957, 16
    %v962 = vshrl.u32 %v957, 16
    %vm963 = vc.u32 %v955, %v959
    %v964 = vsel %vm963, 1, 0
    %v965 = vadd.s32 %v955, %v959
    %v966 = vadd.s32 %v958, %v964
    %vm967 = vc.u32 %v965, %v961
    %v968 = vsel %vm967, 1, 0
    %v969 = vadd.s32 %v965, %v961
    %v970 = vadd.s32 %v966, %v968
    %v971 = vadd.s32 %v970, %v960
    %v972 = vadd.s32 %v971, %v962
    %v973 = vmul.u32 %v928, %v919
    %v974 = vadd.s32 %v950, %v969
    %vm975 = vc.u32 %v950, %v969
    %v976 = vadd.s32 %v972, 1
    %v977 = vsel %vm975, %v976, %v972
    %v978 = vadd.s32 %v973, %v977
    %v979 = vadd.s32 %v978, 536870912
    %v980 = vshrl.u32 %v979, 30
    %v981 = vshll.u32 %v980, 30
    %v982 = vsub.s32 %v978, %v981
    %vm983 = vcmp.lt.s32.totalorder %v982, 0
    %v984 = vsub.s32 0, %v982
    %v985 = vsel %vm983, %v984, %v982
    %v986 = vclz %v985
    %v987 = vsub.s32 %v986, 2
    %vm988 = vcmp.gt.s32.totalorder 0, %v987
    %v989 = vsel %vm988, 0, %v987
    %v990 = vsub.s32 32, %v989
    %v991 = vshll.u32 %v982, %v989
    %v992 = vshrl.u32 %v974, %v990
    %v993 = vor.u32 %v991, %v992
    %v994 = vsub.s32 4294967266, %v989
    %v995 = vadd.s32 %v994, 127
    %v996 = vshll.u32 %v995, 23
    %v997 = vor.u32 4788187, %v996
    %v998 = vand.u32 2147483647, %v997
    %v1000 = vcvt.s32.f32 %v993
    %v1001 = vmul.f32 %v1000, %v998
    %v1002 = vxor.u32 %v1001, 2147483648
    %v1003 = vsel %vm882, %v1002, %v1001
    %v1004 = vsub.s32 4, %v980
    %v1005 = vsel %vm882, %v1004, %v980
    %v1006 = vsel %vm881, %v711, %v1003
    %v1007 = vsel %vm881, 0, %v1005
    %v1008 = vmul.f32 %v1006, %v1006
    %v1009 = vmul.f32 %v1008, -0.001358992
    %v1010 = vadd.f32 %v1009, 0.041655596
    %v1011 = vmul.f32 %v1008, %v1010
    %v1012 = vadd.f32 %v1011, -0.4999988
    %v1013 = vmul.f32 %v1008, %v1012
    %v1014 = vadd.f32 1.0, %v1013
    %v1015 = vmul.f32 %v1006, %v1006
    %v1016 = vmul.f32 %v1015, -0.00019511016
    %v1017 = vadd.f32 %v1016, 0.008332121
    %v1018 = vmul.f32 %v1015, %v1017
    %v1019 = vadd.f32 %v1018, -0.16666654
    %v1020 = vmul.f32 %v1015, %v1019
    %v1021 = vadd.f32 %v1020, 1.0
    %v1022 = vmul.f32 %v1021, %v1006
    %vm1023 = vweird.f32 %v711
    %v1024 = vand.u32 %v1007, 3
    %vm1025 = vcmp.lt.s32.totalorder %v1024, 2
    %vm1026 = vcmp.eq.s32.totalorder %v1024, 0
    %v1027 = vxor.u32 %v1022, 2147483648
    %v1028 = vsel %vm1026, %v1014, %v1027
    %vm1029 = vcmp.eq.s32.totalorder %v1024, 2
    %v1030 = vxor.u32 %v1014, 2147483648
    %v1031 = vsel %vm1029, %v1030, %v1022
    %v1032 = vsel %vm1025, %v1028, %v1031
    %v1033 = vsel %vm1023, nan, %v1032
    %v1034 = vmul.f32 %v714, %v1033
    %1036 = vst [vmem:[#allocation1] ss:$2 sm:$0xff] %v1034
    %v1037 = vld.sshfl [vmem:[#allocation1] sm:$0xff pattern:$0x75316420]
    %v1038 = vld.sshfl [vmem:[#allocation1 + $0x8] sm:$0xff pattern:$0x75316420]
    %v1039 = vrot.slane %v1037, 1
    %v1040 = vrot.slane %v1038, 1
    %1043 = vst [vmem:[#allocation7 + $0x10] sm:$0x80] %v1039
    %1044 = vst [vmem:[#allocation7 + $0x18] sm:$0x80] %v1040
    %1045 = vst [vmem:[#allocation7 + $0x20] sm:$0x3] %v1039
    %1046 = vst [vmem:[#allocation7 + $0x28] sm:$0x3] %v1040
    %v1047 = vmul.f32 %v40, 8.0
    %v1048 = vmul.f32 %v41, -32.0
    %v1049 = vmul.f32 %v1048, 1.442695
    %v1050 = vpow.pop %v1049
    %v1051 = vand.u32 2147483647, %v1047
    %vm1052 = vcmp.le.f32.partialorder %v1051, 0.7853982
    %vm1053 = vcmp.lt.s32.totalorder %v1047, 0
    %v1054 = vand.u32 %v1047, 2139095040
    %v1055 = vshrl.u32 %v1054, 23
    %v1056 = vsub.s32 %v1055, 127
    %v1057 = vand.u32 2147483647, %v1047
    %v1058 = vand.u32 %v1057, 8388607
    %v1059 = vor.u32 %v1058, 8388608
    %v1060 = vsub.s32 0, %v1059
    %v1061 = vadd.s32 %v1056, 1
    %vm1062 = vcmp.gt.s32.totalorder %v1061, 0
    %v1063 = vsel %vm1062, %v1061, 0
    %v1064 = vshrl.u32 %v1063, 5
    %v1065 = vand.u32 %v1063, 31
    %v1066 = vsub.s32 32, %v1065
    %v1067 = vshrl.u32 683565275, %v1066
    %v1068 = vshll.u32 683565275, %v1065
    %v1069 = vshrl.u32 2475754826, %v1066
    %v1070 = vor.u32 %v1068, %v1069
    %v1071 = vshll.u32 2475754826, %v1065
    %v1072 = vshrl.u32 2131351028, %v1066
    %v1073 = vor.u32 %v1071, %v1072
    %v1074 = vshll.u32 2131351028, %v1065
    %v1075 = vshrl.u32 2102212464, %v1066
    %v1076 = vor.u32 %v1074, %v1075
    %v1077 = vshll.u32 2102212464, %v1065
    %v1078 = vshrl.u32 920167782, %v1066
    %v1079 = vor.u32 %v1077, %v1078
    %v1080 = vshll.u32 920167782, %v1065
    %v1081 = vshrl.u32 1326507024, %v1066
    %v1082 = vor.u32 %v1080, %v1081
    %vm1083 = vcmp.lt.s32.totalorder %v1064, 1
    %vm1084 = vcmp.lt.s32.totalorder %v1064, 2
    %vm1085 = vcmp.lt.s32.totalorder %v1064, 3
    %vm1086 = vcmp.lt.s32.totalorder %v1064, 4
    %v1087 = vsel %vm1083, %v1067, %v1070
    %v1088 = vsel %vm1086, %v1076, 2102212464
    %v1089 = vsel %vm1085, %v1073, %v1088
    %v1090 = vsel %vm1084, %v1087, %v1089
    %v1091 = vsel %vm1083, %v1070, %v1073
    %v1092 = vsel %vm1086, %v1079, 920167782
    %v1093 = vsel %vm1085, %v1076, %v1092
    %v1094 = vsel %vm1084, %v1091, %v1093
    %v1095 = vsel %vm1083, %v1073, %v1076
    %v1096 = vsel %vm1086, %v1082, 1326507024
    %v1097 = vsel %vm1085, %v1079, %v1096
    %v1098 = vsel %vm1084, %v1095, %v1097
    %v1099 = vshll.u32 %v1059, 8
    %v1100 = vand.u32 %v1099, 65535
    %v1101 = vshrl.u32 %v1099, 16
    %v1102 = vand.u32 %v1098, 65535
    %v1103 = vshrl.u32 %v1098, 16
    %v1104 = vmul.u32 %v1100, %v1102
    %v1105 = vmul.u32 %v1100, %v1103
    %v1106 = vmul.u32 %v1101, %v1102
    %v1107 = vmul.u32 %v1101, %v1103
    %v1108 = vshll.u32 %v1105, 16
    %v1109 = vshrl.u32 %v1105, 16
    %v1110 = vshll.u32 %v1106, 16
    %v1111 = vshrl.u32 %v1106, 16
    %vm1112 = vc.u32 %v1104, %v1108
    %v1113 = vsel %vm1112, 1, 0
    %v1114 = vadd.s32 %v1104, %v1108
    %v1115 = vadd.s32 %v1107, %v1113
    %vm1116 = vc.u32 %v1114, %v1110
    %v1117 = vsel %vm1116, 1, 0
    %v1118 = vadd.s32 %v1114, %v1110
    %v1119 = vadd.s32 %v1115, %v1117
    %v1120 = vadd.s32 %v1119, %v1109
    %v1121 = vadd.s32 %v1120, %v1111
    %v1122 = vand.u32 %v1099, 65535
    %v1123 = vshrl.u32 %v1099, 16
    %v1124 = vand.u32 %v1094, 65535
    %v1125 = vshrl.u32 %v1094, 16
    %v1126 = vmul.u32 %v1122, %v1124
    %v1127 = vmul.u32 %v1122, %v1125
    %v1128 = vmul.u32 %v1123, %v1124
    %v1129 = vmul.u32 %v1123, %v1125
    %v1130 = vshll.u32 %v1127, 16
    %v1131 = vshrl.u32 %v1127, 16
    %v1132 = vshll.u32 %v1128, 16
    %v1133 = vshrl.u32 %v1128, 16
    %vm1134 = vc.u32 %v1126, %v1130
    %v1135 = vsel %vm1134, 1, 0
    %v1136 = vadd.s32 %v1126, %v1130
    %v1137 = vadd.s32 %v1129, %v1135
    %vm1138 = vc.u32 %v1136, %v1132
    %v1139 = vsel %vm1138, 1, 0
    %v1140 = vadd.s32 %v1136, %v1132
    %v1141 = vadd.s32 %v1137, %v1139
    %v1142 = vadd.s32 %v1141, %v1131
    %v1143 = vadd.s32 %v1142, %v1133
    %v1144 = vmul.u32 %v1099, %v1090
    %v1145 = vadd.s32 %v1121, %v1140
    %vm1146 = vc.u32 %v1121, %v1140
    %v1147 = vadd.s32 %v1143, 1
    %v1148 = vsel %vm1146, %v1147, %v1143
    %v1149 = vadd.s32 %v1144, %v1148
    %v1150 = vadd.s32 %v1149, 536870912
    %v1151 = vshrl.u32 %v1150, 30
    %v1152 = vshll.u32 %v1151, 30
    %v1153 = vsub.s32 %v1149, %v1152
    %vm1154 = vcmp.lt.s32.totalorder %v1153, 0
    %v1155 = vsub.s32 0, %v1153
    %v1156 = vsel %vm1154, %v1155, %v1153
    %v1157 = vclz %v1156
    %v1158 = vsub.s32 %v1157, 2
    %vm1159 = vcmp.gt.s32.totalorder 0, %v1158
    %v1160 = vsel %vm1159, 0, %v1158
    %v1161 = vsub.s32 32, %v1160
    %v1162 = vshll.u32 %v1153, %v1160
    %v1163 = vshrl.u32 %v1145, %v1161
    %v1164 = vor.u32 %v1162, %v1163
    %v1165 = vsub.s32 4294967266, %v1160
    %v1166 = vadd.s32 %v1165, 127
    %v1167 = vshll.u32 %v1166, 23
    %v1168 = vor.u32 4788187, %v1167
    %v1169 = vand.u32 2147483647, %v1168
    %v1171 = vcvt.s32.f32 %v1164
    %v1172 = vmul.f32 %v1171, %v1169
    %v1173 = vxor.u32 %v1172, 2147483648
    %v1174 = vsel %vm1053, %v1173, %v1172
    %v1175 = vsub.s32 4, %v1151
    %v1176 = vsel %vm1053, %v1175, %v1151
    %v1177 = vsel %vm1052, %v1047, %v1174
    %v1178 = vsel %vm1052, 0, %v1176
    %v1179 = vmul.f32 %v1177, %v1177
    %v1180 = vmul.f32 %v1179, -0.001358992
    %v1181 = vadd.f32 %v1180, 0.041655596
    %v1182 = vmul.f32 %v1179, %v1181
    %v1183 = vadd.f32 %v1182, -0.4999988
    %v1184 = vmul.f32 %v1179, %v1183
    %v1185 = vadd.f32 1.0, %v1184
    %v1186 = vmul.f32 %v1177, %v1177
    %v1187 = vmul.f32 %v1186, -0.00019511016
    %v1188 = vadd.f32 %v1187, 0.008332121
    %v1189 = vmul.f32 %v1186, %v1188
    %v1190 = vadd.f32 %v1189, -0.16666654
    %v1191 = vmul.f32 %v1186, %v1190
    %v1192 = vadd.f32 %v1191, 1.0
    %v1193 = vmul.f32 %v1192, %v1177
    %vm1194 = vweird.f32 %v1047
    %v1195 = vadd.s32 %v1178, 3
    %v1196 = vand.u32 %v1195, 3
    %vm1197 = vcmp.lt.s32.totalorder %v1196, 2
    %vm1198 = vcmp.eq.s32.totalorder %v1196, 0
    %v1199 = vxor.u32 %v1193, 2147483648
    %v1200 = vsel %vm1198, %v1185, %v1199
    %vm1201 = vcmp.eq.s32.totalorder %v1196, 2
    %v1202 = vxor.u32 %v1185, 2147483648
    %v1203 = vsel %vm1201, %v1202, %v1193
    %v1204 = vsel %vm1197, %v1200, %v1203
    %v1205 = vsel %vm1194, nan, %v1204
    %v1206 = vmul.f32 %v1050, %v1205
    %1208 = vst [vmem:[#allocation1] ss:$2 sm:$0xff] %v1206
    %v1209 = vld.sshfl [vmem:[#allocation1] sm:$0xff pattern:$0x75316420]
    %v1210 = vld.sshfl [vmem:[#allocation1 + $0x8] sm:$0xff pattern:$0x75316420]
    %v1211 = vrot.slane %v1209, 6
    %v1212 = vrot.slane %v1210, 6
    %1215 = vst [vmem:[#allocation7 + $0x20] sm:$0x1c] %v1211
    %1216 = vst [vmem:[#allocation7 + $0x28] sm:$0x1c] %v1212
    %v1217 = vand.u32 2147483647, %v1047
    %vm1218 = vcmp.le.f32.partialorder %v1217, 0.7853982
    %vm1219 = vcmp.lt.s32.totalorder %v1047, 0
    %v1220 = vand.u32 %v1047, 2139095040
    %v1221 = vshrl.u32 %v1220, 23
    %v1222 = vsub.s32 %v1221, 127
    %v1223 = vand.u32 2147483647, %v1047
    %v1224 = vand.u32 %v1223, 8388607
    %v1225 = vor.u32 %v1224, 8388608
    %v1226 = vsub.s32 0, %v1225
    %v1227 = vadd.s32 %v1222, 1
    %vm1228 = vcmp.gt.s32.totalorder %v1227, 0
    %v1229 = vsel %vm1228, %v1227, 0
    %v1230 = vshrl.u32 %v1229, 5
    %v1231 = vand.u32 %v1229, 31
    %v1232 = vsub.s32 32, %v1231
    %v1233 = vshrl.u32 683565275, %v1232
    %v1234 = vshll.u32 683565275, %v1231
    %v1235 = vshrl.u32 2475754826, %v1232
    %v1236 = vor.u32 %v1234, %v1235
    %v1237 = vshll.u32 2475754826, %v1231
    %v1238 = vshrl.u32 2131351028, %v1232
    %v1239 = vor.u32 %v1237, %v1238
    %v1240 = vshll.u32 2131351028, %v1231
    %v1241 = vshrl.u32 2102212464, %v1232
    %v1242 = vor.u32 %v1240, %v1241
    %v1243 = vshll.u32 2102212464, %v1231
    %v1244 = vshrl.u32 920167782, %v1232
    %v1245 = vor.u32 %v1243, %v1244
    %v1246 = vshll.u32 920167782, %v1231
    %v1247 = vshrl.u32 1326507024, %v1232
    %v1248 = vor.u32 %v1246, %v1247
    %vm1249 = vcmp.lt.s32.totalorder %v1230, 1
    %vm1250 = vcmp.lt.s32.totalorder %v1230, 2
    %vm1251 = vcmp.lt.s32.totalorder %v1230, 3
    %vm1252 = vcmp.lt.s32.totalorder %v1230, 4
    %v1253 = vsel %vm1249, %v1233, %v1236
    %v1254 = vsel %vm1252, %v1242, 2102212464
    %v1255 = vsel %vm1251, %v1239, %v1254
    %v1256 = vsel %vm1250, %v1253, %v1255
    %v1257 = vsel %vm1249, %v1236, %v1239
    %v1258 = vsel %vm1252, %v1245, 920167782
    %v1259 = vsel %vm1251, %v1242, %v1258
    %v1260 = vsel %vm1250, %v1257, %v1259
    %v1261 = vsel %vm1249, %v1239, %v1242
    %v1262 = vsel %vm1252, %v1248, 1326507024
    %v1263 = vsel %vm1251, %v1245, %v1262
    %v1264 = vsel %vm1250, %v1261, %v1263
    %v1265 = vshll.u32 %v1225, 8
    %v1266 = vand.u32 %v1265, 65535
    %v1267 = vshrl.u32 %v1265, 16
    %v1268 = vand.u32 %v1264, 65535
    %v1269 = vshrl.u32 %v1264, 16
    %v1270 = vmul.u32 %v1266, %v1268
    %v1271 = vmul.u32 %v1266, %v1269
    %v1272 = vmul.u32 %v1267, %v1268
    %v1273 = vmul.u32 %v1267, %v1269
    %v1274 = vshll.u32 %v1271, 16
    %v1275 = vshrl.u32 %v1271, 16
    %v1276 = vshll.u32 %v1272, 16
    %v1277 = vshrl.u32 %v1272, 16
    %vm1278 = vc.u32 %v1270, %v1274
    %v1279 = vsel %vm1278, 1, 0
    %v1280 = vadd.s32 %v1270, %v1274
    %v1281 = vadd.s32 %v1273, %v1279
    %vm1282 = vc.u32 %v1280, %v1276
    %v1283 = vsel %vm1282, 1, 0
    %v1284 = vadd.s32 %v1280, %v1276
    %v1285 = vadd.s32 %v1281, %v1283
    %v1286 = vadd.s32 %v1285, %v1275
    %v1287 = vadd.s32 %v1286, %v1277
    %v1288 = vand.u32 %v1265, 65535
    %v1289 = vshrl.u32 %v1265, 16
    %v1290 = vand.u32 %v1260, 65535
    %v1291 = vshrl.u32 %v1260, 16
    %v1292 = vmul.u32 %v1288, %v1290
    %v1293 = vmul.u32 %v1288, %v1291
    %v1294 = vmul.u32 %v1289, %v1290
    %v1295 = vmul.u32 %v1289, %v1291
    %v1296 = vshll.u32 %v1293, 16
    %v1297 = vshrl.u32 %v1293, 16
    %v1298 = vshll.u32 %v1294, 16
    %v1299 = vshrl.u32 %v1294, 16
    %vm1300 = vc.u32 %v1292, %v1296
    %v1301 = vsel %vm1300, 1, 0
    %v1302 = vadd.s32 %v1292, %v1296
    %v1303 = vadd.s32 %v1295, %v1301
    %vm1304 = vc.u32 %v1302, %v1298
    %v1305 = vsel %vm1304, 1, 0
    %v1306 = vadd.s32 %v1302, %v1298
    %v1307 = vadd.s32 %v1303, %v1305
    %v1308 = vadd.s32 %v1307, %v1297
    %v1309 = vadd.s32 %v1308, %v1299
    %v1310 = vmul.u32 %v1265, %v1256
    %v1311 = vadd.s32 %v1287, %v1306
    %vm1312 = vc.u32 %v1287, %v1306
    %v1313 = vadd.s32 %v1309, 1
    %v1314 = vsel %vm1312, %v1313, %v1309
    %v1315 = vadd.s32 %v1310, %v1314
    %v1316 = vadd.s32 %v1315, 536870912
    %v1317 = vshrl.u32 %v1316, 30
    %v1318 = vshll.u32 %v1317, 30
    %v1319 = vsub.s32 %v1315, %v1318
    %vm1320 = vcmp.lt.s32.totalorder %v1319, 0
    %v1321 = vsub.s32 0, %v1319
    %v1322 = vsel %vm1320, %v1321, %v1319
    %v1323 = vclz %v1322
    %v1324 = vsub.s32 %v1323, 2
    %vm1325 = vcmp.gt.s32.totalorder 0, %v1324
    %v1326 = vsel %vm1325, 0, %v1324
    %v1327 = vsub.s32 32, %v1326
    %v1328 = vshll.u32 %v1319, %v1326
    %v1329 = vshrl.u32 %v1311, %v1327
    %v1330 = vor.u32 %v1328, %v1329
    %v1331 = vsub.s32 4294967266, %v1326
    %v1332 = vadd.s32 %v1331, 127
    %v1333 = vshll.u32 %v1332, 23
    %v1334 = vor.u32 4788187, %v1333
    %v1335 = vand.u32 2147483647, %v1334
    %v1337 = vcvt.s32.f32 %v1330
    %v1338 = vmul.f32 %v1337, %v1335
    %v1339 = vxor.u32 %v1338, 2147483648
    %v1340 = vsel %vm1219, %v1339, %v1338
    %v1341 = vsub.s32 4, %v1317
    %v1342 = vsel %vm1219, %v1341, %v1317
    %v1343 = vsel %vm1218, %v1047, %v1340
    %v1344 = vsel %vm1218, 0, %v1342
    %v1345 = vmul.f32 %v1343, %v1343
    %v1346 = vmul.f32 %v1345, -0.001358992
    %v1347 = vadd.f32 %v1346, 0.041655596
    %v1348 = vmul.f32 %v1345, %v1347
    %v1349 = vadd.f32 %v1348, -0.4999988
    %v1350 = vmul.f32 %v1345, %v1349
    %v1351 = vadd.f32 1.0, %v1350
    %v1352 = vmul.f32 %v1343, %v1343
    %v1353 = vmul.f32 %v1352, -0.00019511016
    %v1354 = vadd.f32 %v1353, 0.008332121
    %v1355 = vmul.f32 %v1352, %v1354
    %v1356 = vadd.f32 %v1355, -0.16666654
    %v1357 = vmul.f32 %v1352, %v1356
    %v1358 = vadd.f32 %v1357, 1.0
    %v1359 = vmul.f32 %v1358, %v1343
    %vm1360 = vweird.f32 %v1047
    %v1361 = vand.u32 %v1344, 3
    %vm1362 = vcmp.lt.s32.totalorder %v1361, 2
    %vm1363 = vcmp.eq.s32.totalorder %v1361, 0
    %v1364 = vxor.u32 %v1359, 2147483648
    %v1365 = vsel %vm1363, %v1351, %v1364
    %vm1366 = vcmp.eq.s32.totalorder %v1361, 2
    %v1367 = vxor.u32 %v1351, 2147483648
    %v1368 = vsel %vm1366, %v1367, %v1359
    %v1369 = vsel %vm1362, %v1365, %v1368
    %v1370 = vsel %vm1360, nan, %v1369
    %v1371 = vmul.f32 %v1050, %v1370
    %1373 = vst [vmem:[#allocation1] ss:$2 sm:$0xff] %v1371
    %v1374 = vld.sshfl [vmem:[#allocation1] sm:$0xff pattern:$0x75316420]
    %v1375 = vld.sshfl [vmem:[#allocation1 + $0x8] sm:$0xff pattern:$0x75316420]
    %v1376 = vrot.slane %v1374, 3
    %v1377 = vrot.slane %v1375, 3
    %1380 = vst [vmem:[#allocation7 + $0x20] sm:$0xe0] %v1376
    %1381 = vst [vmem:[#allocation7 + $0x28] sm:$0xe0] %v1377
    // Predicated region
    $region18: #{tpu_custom_call.1} parent=1 // pred_check
      _
    $region19: #{tpu_custom_call.1} parent=1 // pred_check_branch
      %1383 = sbr.rel (0) target = $region21
    $region20: #{tpu_custom_call.1} parent=1 // pred_region
      %1385 = vsyncadd [#allocation4], 0
      %s1386 = sshll.u32 [#allocation7], 4
      %s1387 = int_to_ptr.vmem [resolvable:$true] %s1386
      %s1388 = sshll.u32 %s2, 4
      %s1389 = int_to_ptr.hbm [resolvable:$true] %s1388
      %1394 = dma.vmem_to_hbm [thread:$0]  %s1387, 768, %s1389, [#allocation4], 256, 256, 16
    $region21: #{tpu_custom_call.1} parent=1 // pred_fallthru
      _
    // Predicated region
    $region22: #{tpu_custom_call.1} parent=1 // pred_check
      _
    $region23: #{tpu_custom_call.1} parent=1 // pred_check_branch
      %1396 = sbr.rel (0) target = $region25
    $region24: #{tpu_custom_call.1} parent=1 // pred_region
      %1398 = dma.done [#allocation4], 768
    $region25: #{tpu_custom_call.1} parent=1 // pred_fallthru
      _
    %1399 = vsyncpa [#allocation3], 1
    %1400 = vsyncpa [#allocation6], 1
    %1401 = vsyncpa [#allocation4], 1

</llo_original>
